<compile_context>
chip_gen: v7x
topology: tpu7x:2x2x1
jax: 0.10.0
libtpu: 0.0.40
codegen_flags: <defaults>
</compile_context>

<pallas_src>
import functools

import jax
import jax.numpy as jnp
from jax.experimental import pallas as pl
from jax.experimental.pallas import tpu as pltpu


def _round_up(x, m):
    return ((x + m - 1) // m) * m


# ---------------------------------------------------------------------------
# Pallas kernel: fc1 -> LeakyReLU -> fc2 -> LeakyReLU -> fc3 -> Sigmoid,
# with the final view/permute fused via per-`num` regrouped (128-padded)
# fc3 columns and a (num, tb, 128) output block.
# ---------------------------------------------------------------------------
def _goal_decoder_kernel(x_ref, w1_ref, b1_ref, w2_ref, b2_ref, w3_ref, b3_ref,
                         o_ref):
    num, _, odp = o_ref.shape

    # fc1 + LeakyReLU(0.01)  (single bf16 MXU pass, f32 accumulation)
    h = jnp.dot(x_ref[...].astype(jnp.bfloat16), w1_ref[...],
                preferred_element_type=jnp.float32) + b1_ref[...]
    h = jnp.maximum(h, 0.01 * h)

    # fc2 + LeakyReLU(0.01)
    h = jnp.dot(h.astype(jnp.bfloat16), w2_ref[...],
                preferred_element_type=jnp.float32) + b2_ref[...]
    h = jnp.maximum(h, 0.01 * h)

    # fc3 (columns regrouped per `num`, each group padded to 128) + Sigmoid.
    # Exact sigmoid: exp on EUP, precise divide (robust for large |h|).
    h = jnp.dot(h.astype(jnp.bfloat16), w3_ref[...],
                preferred_element_type=jnp.float32) + b3_ref[...]
    h = 1.0 / (1.0 + jnp.exp(-h))

    # Fused view(-1, num, d).permute(1, 0, 2): 128-aligned lane slices.
    for g in range(num):
        o_ref[g] = h[:, g * odp:(g + 1) * odp].astype(o_ref.dtype)


def _const_spec(shape):
    # Whole-array block, resident across all grid steps (constant index_map).
    return pl.BlockSpec(shape, lambda i, _s=len(shape): (0,) * _s)


# ---------------------------------------------------------------------------
# One-time parameter preparation (hoisted out of the per-call forward):
#   * cast weights to bf16 (single-pass MXU), keep biases f32,
#   * regroup fc3 columns by `num`, padding each output_dim-wide group to a
#     multiple of 128 so the kernel can emit (num, B, 128) directly.
# ---------------------------------------------------------------------------
def prepare_params(params, num):
    w1, b1, w2, b2, w3, b3 = params
    out_cols = w3.shape[1]
    output_dim = out_cols // num
    odp = _round_up(output_dim, 128)

    def regroup(a):
        groups = [
            jnp.pad(a[:, g * output_dim:(g + 1) * output_dim],
                    ((0, 0), (0, odp - output_dim)))
            for g in range(num)
        ]
        return jnp.concatenate(groups, axis=1)

    w3g = regroup(w3)
    b3g = regroup(b3)
    prepped = (w1.astype(jnp.bfloat16), b1.astype(jnp.float32),
               w2.astype(jnp.bfloat16), b2.astype(jnp.float32),
               w3g.astype(jnp.bfloat16), b3g.astype(jnp.float32))
    return prepped, output_dim


# ---------------------------------------------------------------------------
# Forward pass (mirrors GoalDecoder.forward)
# ---------------------------------------------------------------------------
@functools.partial(jax.jit,
                   static_argnames=("num", "output_dim", "batch_tile",
                                    "out_dtype"))
def goal_decoder_forward(vector_input, scalar_input, prepped, num, output_dim,
                         batch_tile=2048, out_dtype=jnp.float32):
    """vector_input: [B, input_dim], scalar_input: [B, scalar_dim]  (float32)
    Returns [num, B, output_dim] in `out_dtype` (default float32)."""
    w1, b1, w2, b2, w3g, b3g = prepped

    B = vector_input.shape[0]
    # torch.cat((vector_input, scalar_input), dim=1): tiny (B x ~40) XLA op,
    # lets fc1 run as a single MXU matmul inside the kernel.
    x = jnp.concatenate([vector_input, scalar_input], axis=1)
    din = x.shape[1]
    hidden = w1.shape[1]
    h2 = w2.shape[1]
    odp = w3g.shape[1] // num          # 128-padded per-group output width

    # Batch tiling: aim for >= 4 grid steps (v7x megacore sharding + DMA/compute
    # overlap) while allowing tiles up to `batch_tile` to amortize per-step
    # overhead on v5e.  Rows per step are a multiple of 8 (sublane).
    tb = min(batch_tile, max(8, _round_up(pl.cdiv(B, 4), 8)))
    Bp = _round_up(B, tb)
    if Bp != B:
        x = jnp.pad(x, ((0, Bp - B), (0, 0)))
    grid = (Bp // tb,)

    # VMEM budget computed from actual tile / weight sizes (+ headroom),
    # clamped to [8 MiB, 32 MiB] so v7x's 64 MiB VMEM is not starved.
    out_itemsize = jnp.dtype(out_dtype).itemsize
    tile_bytes = tb * din * 4 + num * tb * odp * out_itemsize
    weight_bytes = (din * hidden + hidden * h2 + h2 * num * odp) * 2 \
        + (hidden + h2 + num * odp) * 4
    interm_bytes = tb * (hidden + h2 + num * odp) * 4 * 2
    vmem_bytes = 2 * tile_bytes + 2 * weight_bytes + interm_bytes + (2 << 20)
    vmem_bytes = max(8 << 20, min(vmem_bytes, 32 << 20))

    flops = 2 * Bp * (din * hidden + hidden * h2 + h2 * num * odp)
    bytes_accessed = (Bp * din * 4 + num * Bp * odp * out_itemsize
                      + weight_bytes)
    cost = pl.CostEstimate(flops=flops,
                           transcendentals=Bp * num * odp,
                           bytes_accessed=bytes_accessed)

    out = pl.pallas_call(
        _goal_decoder_kernel,
        out_shape=jax.ShapeDtypeStruct((num, Bp, odp), out_dtype),
        grid=grid,
        in_specs=[
            pl.BlockSpec((tb, din), lambda i: (i, 0)),    # concatenated input tile
            _const_spec(w1.shape), _const_spec(b1.shape),
            _const_spec(w2.shape), _const_spec(b2.shape),
            _const_spec(w3g.shape), _const_spec(b3g.shape),
        ],
        out_specs=pl.BlockSpec((num, tb, odp), lambda i: (0, i, 0)),
        compiler_params=pltpu.CompilerParams(
            dimension_semantics=("parallel",),
            vmem_limit_bytes=int(vmem_bytes)),
        cost_estimate=cost,
    )(x, w1, b1, w2, b2, w3g, b3g)

    # Drop batch padding and the per-group lane padding (padded lanes hold
    # sigmoid(0) = 0.5).  No transpose needed: the kernel already emitted the
    # permuted (num, B, d) layout.
    return out[:, :B, :output_dim]


# ---------------------------------------------------------------------------
# Deterministic parameter initialization (shapes from GoalDecoder.__init__)
# ---------------------------------------------------------------------------
def init_params(key, input_dim, scalar_dim, hidden_dim, output_dim, num):
    k1, k2, k3, k4, k5, k6 = jax.random.split(key, 6)
    in1 = input_dim + scalar_dim
    h2 = hidden_dim // 2
    out = output_dim * num
    # Weights stored [in, out]; biases stored [1, out] (broadcast over batch).
    w1 = jax.random.normal(k1, (in1, hidden_dim), jnp.float32) * 0.1
    b1 = jax.random.normal(k2, (1, hidden_dim), jnp.float32) * 0.1
    w2 = jax.random.normal(k3, (hidden_dim, h2), jnp.float32) * 0.1
    b2 = jax.random.normal(k4, (1, h2), jnp.float32) * 0.1
    w3 = jax.random.normal(k5, (h2, out), jnp.float32) * 0.1
    b3 = jax.random.normal(k6, (1, out), jnp.float32) * 0.1
    return (w1, b1, w2, b2, w3, b3)


# ---------------------------------------------------------------------------
# Pure-JAX f32 reference (sanity check)
# ---------------------------------------------------------------------------
def goal_decoder_ref(vector_input, scalar_input, params, num):
    w1, b1, w2, b2, w3, b3 = params
    x = jnp.concatenate([vector_input, scalar_input], axis=1)
    h = x @ w1 + b1
    h = jnp.where(h > 0, h, 0.01 * h)
    h = h @ w2 + b2
    h = jnp.where(h > 0, h, 0.01 * h)
    h = h @ w3 + b3
    h = jax.nn.sigmoid(h)
    h = h.reshape(-1, num, w3.shape[1] // num)
    return jnp.transpose(h, (1, 0, 2))


if __name__ == "__main__":
    # Small shapes consistent with the module.  forward hard-codes
    # view(-1, num, 75), so output_dim must be 75.
    batch = 4
    input_dim = 32
    scalar_dim = 8
    hidden_dim = 32
    output_dim = 75
    num = 3

    key = jax.random.PRNGKey(0)
    kp, kv, ks = jax.random.split(key, 3)

    params = init_params(kp, input_dim, scalar_dim, hidden_dim, output_dim, num)
    vector_input = jax.random.normal(kv, (batch, input_dim), jnp.float32)
    scalar_input = jax.random.normal(ks, (batch, scalar_dim), jnp.float32)

    # One-time parameter prep (bf16 cast + fc3 column regroup/pad).
    prepped, out_dim = prepare_params(params, num)
    prepped = jax.block_until_ready(prepped)

    out = goal_decoder_forward(vector_input, scalar_input, prepped,
                               num=num, output_dim=out_dim)
    out = jax.block_until_ready(out)

    assert out.shape == (num, batch, output_dim), out.shape

    ref = goal_decoder_ref(vector_input, scalar_input, params, num)
    # Tolerance accounts for bf16 matmul operands (f32 accumulation); outputs
    # are sigmoid values in [0, 1].
    assert jnp.allclose(out, ref, atol=2e-2, rtol=2e-2), "mismatch vs reference"

    print("KERNEL_OK")
</pallas_src>

<mosaic_0001>
module attributes {stable_mosaic.version = 11 : i64} {
  func.func @_goal_decoder_kernel(%arg0: i32, %arg1: memref<8x40xf32, #tpu.memory_space<vmem>>, %arg2: memref<40x32xbf16, #tpu.memory_space<vmem>>, %arg3: memref<1x32xf32, #tpu.memory_space<vmem>>, %arg4: memref<32x16xbf16, #tpu.memory_space<vmem>>, %arg5: memref<1x16xf32, #tpu.memory_space<vmem>>, %arg6: memref<16x384xbf16, #tpu.memory_space<vmem>>, %arg7: memref<1x384xf32, #tpu.memory_space<vmem>>, %arg8: memref<3x8x128xf32, #tpu.memory_space<vmem>>) attributes {dimension_semantics = [#tpu.dimension_semantics<parallel>], iteration_bounds = array<i64: 1>, scalar_prefetch = 0 : i64, scratch_operands = 0 : i64, tpu.core_type = #tpu.core_type<tc>, window_params = [{transform_indices = @transform_0, window_bounds = array<i64: 8, 40>}, {pipeline_mode = #tpu.pipeline_mode<synchronous>, transform_indices = @transform_1, window_bounds = array<i64: 40, 32>}, {pipeline_mode = #tpu.pipeline_mode<synchronous>, transform_indices = @transform_2, window_bounds = array<i64: 1, 32>}, {pipeline_mode = #tpu.pipeline_mode<synchronous>, transform_indices = @transform_3, window_bounds = array<i64: 32, 16>}, {pipeline_mode = #tpu.pipeline_mode<synchronous>, transform_indices = @transform_4, window_bounds = array<i64: 1, 16>}, {pipeline_mode = #tpu.pipeline_mode<synchronous>, transform_indices = @transform_5, window_bounds = array<i64: 16, 384>}, {pipeline_mode = #tpu.pipeline_mode<synchronous>, transform_indices = @transform_6, window_bounds = array<i64: 1, 384>}, {transform_indices = @transform_7, window_bounds = array<i64: 3, 8, 128>}]} {
    %c0 = arith.constant 0 : index
    %c0_0 = arith.constant 0 : index
    %0 = vector.load %arg1[%c0, %c0_0] : memref<8x40xf32, #tpu.memory_space<vmem>>, vector<8x40xf32>
    %1 = arith.truncf %0 : vector<8x40xf32> to vector<8x40xbf16>
    %c0_1 = arith.constant 0 : index
    %c0_2 = arith.constant 0 : index
    %2 = vector.load %arg2[%c0_1, %c0_2] : memref<40x32xbf16, #tpu.memory_space<vmem>>, vector<40x32xbf16>
    %cst = arith.constant dense<0.000000e+00> : vector<8x32xf32>
    %3 = tpu.matmul %1, %2, %cst {dimension_numbers = #tpu.dot_dimension_numbers<[1], [0], [0], [1], [0, 0, 1, 1], [], []>} : vector<8x40xbf16>, vector<40x32xbf16>, vector<8x32xf32> -> vector<8x32xf32>
    %c0_3 = arith.constant 0 : index
    %c0_4 = arith.constant 0 : index
    %4 = vector.load %arg3[%c0_3, %c0_4] : memref<1x32xf32, #tpu.memory_space<vmem>>, vector<1x32xf32>
    %5 = vector.broadcast %4 : vector<1x32xf32> to vector<8x32xf32>
    %6 = arith.addf %3, %5 : vector<8x32xf32>
    %cst_5 = arith.constant 0.00999999977 : f32
    %7 = vector.broadcast %cst_5 : f32 to vector<8x32xf32>
    %8 = arith.mulf %7, %6 : vector<8x32xf32>
    %9 = arith.maximumf %6, %8 : vector<8x32xf32>
    %10 = arith.truncf %9 : vector<8x32xf32> to vector<8x32xbf16>
    %c0_6 = arith.constant 0 : index
    %c0_7 = arith.constant 0 : index
    %11 = vector.load %arg4[%c0_6, %c0_7] : memref<32x16xbf16, #tpu.memory_space<vmem>>, vector<32x16xbf16>
    %cst_8 = arith.constant dense<0.000000e+00> : vector<8x16xf32>
    %12 = tpu.matmul %10, %11, %cst_8 {dimension_numbers = #tpu.dot_dimension_numbers<[1], [0], [0], [1], [0, 0, 1, 1], [], []>} : vector<8x32xbf16>, vector<32x16xbf16>, vector<8x16xf32> -> vector<8x16xf32>
    %c0_9 = arith.constant 0 : index
    %c0_10 = arith.constant 0 : index
    %13 = vector.load %arg5[%c0_9, %c0_10] : memref<1x16xf32, #tpu.memory_space<vmem>>, vector<1x16xf32>
    %14 = vector.broadcast %13 : vector<1x16xf32> to vector<8x16xf32>
    %15 = arith.addf %12, %14 : vector<8x16xf32>
    %cst_11 = arith.constant 0.00999999977 : f32
    %16 = vector.broadcast %cst_11 : f32 to vector<8x16xf32>
    %17 = arith.mulf %16, %15 : vector<8x16xf32>
    %18 = arith.maximumf %15, %17 : vector<8x16xf32>
    %19 = arith.truncf %18 : vector<8x16xf32> to vector<8x16xbf16>
    %c0_12 = arith.constant 0 : index
    %c0_13 = arith.constant 0 : index
    %20 = vector.load %arg6[%c0_12, %c0_13] : memref<16x384xbf16, #tpu.memory_space<vmem>>, vector<16x384xbf16>
    %cst_14 = arith.constant dense<0.000000e+00> : vector<8x384xf32>
    %21 = tpu.matmul %19, %20, %cst_14 {dimension_numbers = #tpu.dot_dimension_numbers<[1], [0], [0], [1], [0, 0, 1, 1], [], []>} : vector<8x16xbf16>, vector<16x384xbf16>, vector<8x384xf32> -> vector<8x384xf32>
    %c0_15 = arith.constant 0 : index
    %c0_16 = arith.constant 0 : index
    %22 = vector.load %arg7[%c0_15, %c0_16] : memref<1x384xf32, #tpu.memory_space<vmem>>, vector<1x384xf32>
    %23 = vector.broadcast %22 : vector<1x384xf32> to vector<8x384xf32>
    %24 = arith.addf %21, %23 : vector<8x384xf32>
    %cst_17 = arith.constant 0.000000e+00 : f32
    %25 = vector.broadcast %cst_17 : f32 to vector<8x384xf32>
    %26 = arith.subf %25, %24 : vector<8x384xf32>
    %27 = math.exp %26 : vector<8x384xf32>
    %cst_18 = arith.constant 1.000000e+00 : f32
    %28 = vector.broadcast %cst_18 : f32 to vector<8x384xf32>
    %29 = arith.addf %28, %27 : vector<8x384xf32>
    %cst_19 = arith.constant 1.000000e+00 : f32
    %30 = vector.broadcast %cst_19 : f32 to vector<8x384xf32>
    %31 = arith.divf %30, %29 : vector<8x384xf32>
    %32 = vector.extract_strided_slice %31 {offsets = [0, 0], sizes = [8, 128], strides = [1, 1]} : vector<8x384xf32> to vector<8x128xf32>
    %c0_20 = arith.constant 0 : index
    %c0_21 = arith.constant 0 : index
    %c0_22 = arith.constant 0 : index
    %33 = vector.load %arg8[%c0_20, %c0_21, %c0_22] : memref<3x8x128xf32, #tpu.memory_space<vmem>>, vector<1x8x128xf32>
    %34 = vector.shape_cast %33 : vector<1x8x128xf32> to vector<8x128xf32>
    %35 = vector.shape_cast %32 : vector<8x128xf32> to vector<1x8x128xf32>
    tpu.vector_store %arg8[%c0_20, %c0_21, %c0_22], %35 {strides = array<i32>} : memref<3x8x128xf32, #tpu.memory_space<vmem>>, vector<1x8x128xf32>,
    %36 = vector.extract_strided_slice %31 {offsets = [0, 128], sizes = [8, 128], strides = [1, 1]} : vector<8x384xf32> to vector<8x128xf32>
    %c1 = arith.constant 1 : index
    %c0_23 = arith.constant 0 : index
    %c0_24 = arith.constant 0 : index
    %37 = vector.load %arg8[%c1, %c0_23, %c0_24] : memref<3x8x128xf32, #tpu.memory_space<vmem>>, vector<1x8x128xf32>
    %38 = vector.shape_cast %37 : vector<1x8x128xf32> to vector<8x128xf32>
    %39 = vector.shape_cast %36 : vector<8x128xf32> to vector<1x8x128xf32>
    tpu.vector_store %arg8[%c1, %c0_23, %c0_24], %39 {strides = array<i32>} : memref<3x8x128xf32, #tpu.memory_space<vmem>>, vector<1x8x128xf32>,
    %40 = vector.extract_strided_slice %31 {offsets = [0, 256], sizes = [8, 128], strides = [1, 1]} : vector<8x384xf32> to vector<8x128xf32>
    %c2 = arith.constant 2 : index
    %c0_25 = arith.constant 0 : index
    %c0_26 = arith.constant 0 : index
    %41 = vector.load %arg8[%c2, %c0_25, %c0_26] : memref<3x8x128xf32, #tpu.memory_space<vmem>>, vector<1x8x128xf32>
    %42 = vector.shape_cast %41 : vector<1x8x128xf32> to vector<8x128xf32>
    %43 = vector.shape_cast %40 : vector<8x128xf32> to vector<1x8x128xf32>
    tpu.vector_store %arg8[%c2, %c0_25, %c0_26], %43 {strides = array<i32>} : memref<3x8x128xf32, #tpu.memory_space<vmem>>, vector<1x8x128xf32>,
    return
  }
  func.func @transform_0(%arg0: i32) -> (i32, i32) {
    %c0_i32 = arith.constant 0 : i32
    %c0_i32_0 = arith.constant 0 : i32
    return %arg0, %c0_i32 : i32, i32
  }
  func.func @transform_1(%arg0: i32) -> (i32, i32) {
    %c0_i32 = arith.constant 0 : i32
    %c0_i32_0 = arith.constant 0 : i32
    %c0_i32_1 = arith.constant 0 : i32
    return %c0_i32, %c0_i32_0 : i32, i32
  }
  func.func @transform_2(%arg0: i32) -> (i32, i32) {
    %c0_i32 = arith.constant 0 : i32
    %c0_i32_0 = arith.constant 0 : i32
    %c0_i32_1 = arith.constant 0 : i32
    return %c0_i32, %c0_i32_0 : i32, i32
  }
  func.func @transform_3(%arg0: i32) -> (i32, i32) {
    %c0_i32 = arith.constant 0 : i32
    %c0_i32_0 = arith.constant 0 : i32
    %c0_i32_1 = arith.constant 0 : i32
    return %c0_i32, %c0_i32_0 : i32, i32
  }
  func.func @transform_4(%arg0: i32) -> (i32, i32) {
    %c0_i32 = arith.constant 0 : i32
    %c0_i32_0 = arith.constant 0 : i32
    %c0_i32_1 = arith.constant 0 : i32
    return %c0_i32, %c0_i32_0 : i32, i32
  }
  func.func @transform_5(%arg0: i32) -> (i32, i32) {
    %c0_i32 = arith.constant 0 : i32
    %c0_i32_0 = arith.constant 0 : i32
    %c0_i32_1 = arith.constant 0 : i32
    return %c0_i32, %c0_i32_0 : i32, i32
  }
  func.func @transform_6(%arg0: i32) -> (i32, i32) {
    %c0_i32 = arith.constant 0 : i32
    %c0_i32_0 = arith.constant 0 : i32
    %c0_i32_1 = arith.constant 0 : i32
    return %c0_i32, %c0_i32_0 : i32, i32
  }
  func.func @transform_7(%arg0: i32) -> (i32, i32, i32) {
    %c0_i32 = arith.constant 0 : i32
    %c0_i32_0 = arith.constant 0 : i32
    %c0_i32_1 = arith.constant 0 : i32
    return %c0_i32, %arg0, %c0_i32_0 : i32, i32, i32
  }
}

</mosaic_0001>

<llo_original>
// kernel: goal_decoder_forward.1
$region0: #{goal_decoder_forward.1}
  #allocation0 [shape = 'u32[]', space=smem, size = 0x4, offset = 0x4, fixed_abs, tag = 'smem constant byte address 0x4 - core index']
  #allocation1 [shape = 'u32[144,128]{1,0:T(1,128)}', space=vmem, size = 0x12000, scoped, tag = 'internal scratch']
  %s0 = inlined_call_operand.vmem [shape: f32[8,40], index: 0, kind: input, shape index: {}]
  %s1 = inlined_call_operand.vmem [shape: bf16[40,32], index: 1, kind: input, shape index: {}]
  %s2 = inlined_call_operand.vmem [shape: f32[1,32], index: 2, kind: input, shape index: {}]
  %s3 = inlined_call_operand.vmem [shape: bf16[32,16], index: 3, kind: input, shape index: {}]
  %s4 = inlined_call_operand.vmem [shape: f32[1,16], index: 4, kind: input, shape index: {}]
  %s5 = inlined_call_operand.vmem [shape: bf16[16,384], index: 5, kind: input, shape index: {}]
  %s6 = inlined_call_operand.vmem [shape: f32[1,384], index: 6, kind: input, shape index: {}]
  %s7 = inlined_call_operand.vmem [shape: f32[3,8,128], index: 7, kind: output, shape index: {}]
  %s8 = sld [smem:[#allocation0]]
  $region38: #{goal_decoder_forward.1} parent=0
    _
  %s10 = ssub.s32 1, %s8
  %s11 = scalar_select 0, %s10, %s8
  // Predicated region
  $region2: #{goal_decoder_forward.1} parent=0 // pred_check
    _
  $region3: #{goal_decoder_forward.1} parent=0 // pred_check_branch
    %13 = sbr.rel (0) target = $region5
  $region4: #{goal_decoder_forward.1} parent=0 // pred_region
    _
  $region5: #{goal_decoder_forward.1} parent=0 // pred_fallthru
    _
  // Predicated region
  $region6: #{goal_decoder_forward.1} parent=0 // pred_check
    _
  $region7: #{goal_decoder_forward.1} parent=0 // pred_check_branch
    %15 = sbr.rel (0) target = $region9
  $region8: #{goal_decoder_forward.1} parent=0 // pred_region
    _
  $region9: #{goal_decoder_forward.1} parent=0 // pred_fallthru
    _
  // Predicated region
  $region10: #{goal_decoder_forward.1} parent=0 // pred_check
    _
  $region11: #{goal_decoder_forward.1} parent=0 // pred_check_branch
    %17 = sbr.rel (0) target = $region13
  $region12: #{goal_decoder_forward.1} parent=0 // pred_region
    _
  $region13: #{goal_decoder_forward.1} parent=0 // pred_fallthru
    _
  // Predicated region
  $region14: #{goal_decoder_forward.1} parent=0 // pred_check
    _
  $region15: #{goal_decoder_forward.1} parent=0 // pred_check_branch
    %19 = sbr.rel (0) target = $region17
  $region16: #{goal_decoder_forward.1} parent=0 // pred_region
    _
  $region17: #{goal_decoder_forward.1} parent=0 // pred_fallthru
    _
  // Predicated region
  $region18: #{goal_decoder_forward.1} parent=0 // pred_check
    _
  $region19: #{goal_decoder_forward.1} parent=0 // pred_check_branch
    %21 = sbr.rel (0) target = $region21
  $region20: #{goal_decoder_forward.1} parent=0 // pred_region
    _
  $region21: #{goal_decoder_forward.1} parent=0 // pred_fallthru
    _
  // Predicated region
  $region22: #{goal_decoder_forward.1} parent=0 // pred_check
    _
  $region23: #{goal_decoder_forward.1} parent=0 // pred_check_branch
    %23 = sbr.rel (0) target = $region25
  $region24: #{goal_decoder_forward.1} parent=0 // pred_region
    _
  $region25: #{goal_decoder_forward.1} parent=0 // pred_fallthru
    _
  // Predicated region
  $region26: #{goal_decoder_forward.1} parent=0 // pred_check
    _
  $region27: #{goal_decoder_forward.1} parent=0 // pred_check_branch
    %25 = sbr.rel (0) target = $region29
  $region28: #{goal_decoder_forward.1} parent=0 // pred_region
    _
  $region29: #{goal_decoder_forward.1} parent=0 // pred_fallthru
    _
  %v27 = vld [vmem:[%s0] sm:$0xff]
  %v28 = vpack.c.bf16 %v27, %v27
  %v29 = vld [vmem:[%s1] sm:$0xf]
  %v30 = vld [vmem:[%s1 + $0x4] sm:$0xf]
  %v31 = vld [vmem:[%s1 + $0x8] sm:$0xf]
  %v32 = vld [vmem:[%s1 + $0xc] sm:$0xf]
  %v33 = vld [vmem:[%s1 + $0x10] sm:$0xf]
  %v34 = vld [vmem:[%s2] sm:$0x1]
  %v36 = vlaneseq
  %v37 = vshrl.u32 %v36, 7
  %v38 = vsub.s32 0, %v37
  %v39 = vrot.slane %v34, %v38
  %v46 = vunpack.c.l.b16 %v29
  %v47 = vunpack.c.l.b16 %v30
  %v48 = vunpack.c.l.b16 %v31
  %v49 = vunpack.c.l.b16 %v32
  %v50 = vunpack.c.l.b16 %v33
  %v51 = vpack.c.b16 %v47, %v46
  %v52 = vpack.c.b16 %v49, %v48
  %v53 = vpack.c.b16 %v50, %v50
  %vm56 = vcmask 326656
  %v58 = vsel %vm56, %v28, 0
  %vm60 = vcmask 1043456
  %v62 = vsel %vm60, %v53, 0
  %64 = vmatprep.subr.bf16.mxu0 0
  %65 = vmatpush1.bf16.msra.mxu0 %v51
  %66 = vmatprep.subr.bf16.mxu0 0
  %67 = vmatpush1.bf16.msra.mxu0 %v52
  %68 = vmatprep.subr.bf16.mxu0 0
  %69 = vmatpush1.bf16.msra.mxu0 %v62
  %70 = vmatprep.subr.bf16.mxu0 0
  %71 = vmatpush1.bf16.msra.mxu0 0
  %72 = vmatprep.subr.bf16.mxu0 0
  %73 = vmatpush1.bf16.msra.mxu0 0
  %74 = vmatprep.subr.bf16.mxu0 0
  %75 = vmatpush1.bf16.msra.mxu0 0
  %76 = vmatprep.subr.bf16.mxu0 0
  %77 = vmatpush1.bf16.msra.mxu0 0
  %78 = vmatprep.subr.bf16.mxu0 0
  %79 = vmatpush1.bf16.msra.mxu0 0
  %80 = vmatprep.subr.bf16.mxu0 0
  %81 = vmatpush1.bf16.msra.mxu0 0
  %82 = vmatprep.subr.bf16.mxu0 0
  %83 = vmatpush1.bf16.msra.mxu0 0
  %84 = vmatprep.subr.bf16.mxu0 0
  %85 = vmatpush1.bf16.msra.mxu0 0
  %86 = vmatprep.subr.bf16.mxu0 0
  %87 = vmatpush1.bf16.msra.mxu0 0
  %88 = vmatprep.subr.bf16.mxu0 0
  %89 = vmatpush1.bf16.msra.mxu0 0
  %90 = vmatprep.subr.bf16.mxu0 0
  %91 = vmatpush1.bf16.msra.mxu0 0
  %92 = vmatprep.subr.bf16.mxu0 0
  %93 = vmatpush1.bf16.msra.mxu0 0
  %94 = vmatprep.subr.bf16.mxu0 0
  %95 = vmatpush1.bf16.msra.mxu0 0
  %96 = vmatprep.mubr.bf16.mxu0 0
  %97 = vmatmul.mubr.bf16.gmra.mrb[0].mxu0 %v58
  %v98 = vpop.f32.mrb[0].mxu0
  %v99 = vadd.f32 %v39, %v98
  %v100 = vpop.f32.mrb[0].mxu0
  %v101 = vpop.f32.mrb[0].mxu0
  %v102 = vpop.f32.mrb[0].mxu0
  %103 = vdwg.mxu0
  %v104 = vmul.f32 %v99, 0.01
  %v105 = vmax.f32 %v99, %v104
  %v106 = vpack.c.bf16 %v105, %v105
  %v107 = vld [vmem:[%s3] sm:$0xf]
  %v108 = vld [vmem:[%s3 + $0x4] sm:$0xf]
  %v109 = vld [vmem:[%s3 + $0x8] sm:$0xf]
  %v110 = vld [vmem:[%s3 + $0xc] sm:$0xf]
  %v111 = vld [vmem:[%s4] sm:$0x1]
  %v113 = vlaneseq
  %v114 = vshrl.u32 %v113, 7
  %v115 = vsub.s32 0, %v114
  %v116 = vrot.slane %v111, %v115
  %v122 = vunpack.c.l.b16 %v107
  %v123 = vunpack.c.l.b16 %v108
  %v124 = vunpack.c.l.b16 %v109
  %v125 = vunpack.c.l.b16 %v110
  %v126 = vpack.c.b16 %v123, %v122
  %v127 = vpack.c.b16 %v125, %v124
  %vm130 = vcmask 261120
  %v132 = vsel %vm130, %v106, 0
  %134 = vmatprep.subr.bf16.mxu0 0
  %135 = vmatpush1.bf16.msra.mxu0 %v126
  %136 = vmatprep.subr.bf16.mxu0 0
  %137 = vmatpush1.bf16.msra.mxu0 %v127
  %138 = vmatprep.subr.bf16.mxu0 0
  %139 = vmatpush1.bf16.msra.mxu0 0
  %140 = vmatprep.subr.bf16.mxu0 0
  %141 = vmatpush1.bf16.msra.mxu0 0
  %142 = vmatprep.subr.bf16.mxu0 0
  %143 = vmatpush1.bf16.msra.mxu0 0
  %144 = vmatprep.subr.bf16.mxu0 0
  %145 = vmatpush1.bf16.msra.mxu0 0
  %146 = vmatprep.subr.bf16.mxu0 0
  %147 = vmatpush1.bf16.msra.mxu0 0
  %148 = vmatprep.subr.bf16.mxu0 0
  %149 = vmatpush1.bf16.msra.mxu0 0
  %150 = vmatprep.subr.bf16.mxu0 0
  %151 = vmatpush1.bf16.msra.mxu0 0
  %152 = vmatprep.subr.bf16.mxu0 0
  %153 = vmatpush1.bf16.msra.mxu0 0
  %154 = vmatprep.subr.bf16.mxu0 0
  %155 = vmatpush1.bf16.msra.mxu0 0
  %156 = vmatprep.subr.bf16.mxu0 0
  %157 = vmatpush1.bf16.msra.mxu0 0
  %158 = vmatprep.subr.bf16.mxu0 0
  %159 = vmatpush1.bf16.msra.mxu0 0
  %160 = vmatprep.subr.bf16.mxu0 0
  %161 = vmatpush1.bf16.msra.mxu0 0
  %162 = vmatprep.subr.bf16.mxu0 0
  %163 = vmatpush1.bf16.msra.mxu0 0
  %164 = vmatprep.subr.bf16.mxu0 0
  %165 = vmatpush1.bf16.msra.mxu0 0
  %166 = vmatprep.mubr.bf16.mxu0 0
  %167 = vmatmul.mubr.bf16.gmra.mrb[0].mxu0 %v132
  %v168 = vpop.f32.mrb[0].mxu0
  %v169 = vadd.f32 %v116, %v168
  %v170 = vpop.f32.mrb[0].mxu0
  %v171 = vpop.f32.mrb[0].mxu0
  %v172 = vpop.f32.mrb[0].mxu0
  %173 = vdwg.mxu0
  %v174 = vmul.f32 %v169, 0.01
  %v175 = vmax.f32 %v169, %v174
  %v176 = vpack.c.bf16 %v175, %v175
  %v177 = vld [vmem:[%s5] sm:$0xff]
  %v178 = vld [vmem:[%s5 + $0x8] sm:$0xf]
  %v179 = vld [vmem:[%s5 + $0xc] sm:$0xff]
  %v180 = vld [vmem:[%s5 + $0x14] sm:$0xf]
  %v181 = vld [vmem:[%s6] sm:$0x7]
  %v183 = vlaneseq
  %v184 = vshrl.u32 %v183, 7
  %v185 = vsub.s32 0, %v184
  %v186 = vrot.slane %v181, %v185
  %v187 = vlaneseq
  %v188 = vshrl.u32 %v187, 7
  %v189 = vsub.s32 1, %v188
  %v190 = vrot.slane %v181, %v189
  %v191 = vlaneseq
  %v192 = vshrl.u32 %v191, 7
  %v193 = vsub.s32 2, %v192
  %v194 = vrot.slane %v181, %v193
  %v202 = vunpack.c.l.b16 %v177
  %v203 = vunpack.c.h.b16 %v177
  %v204 = vunpack.c.l.b16 %v178
  %v205 = vunpack.c.l.b16 %v179
  %v206 = vunpack.c.h.b16 %v179
  %v207 = vunpack.c.l.b16 %v180
  %v208 = vpack.c.b16 %v205, %v202
  %v209 = vpack.c.b16 %v206, %v203
  %v210 = vpack.c.b16 %v207, %v204
  %vm214 = vcmask 130048
  %v216 = vsel %vm214, %v176, 0
  %218 = vmatprep.subr.bf16.mxu0 %v209
  %219 = vmatpush1.bf16.msra.mxu0 %v208
  %220 = vmatprep.subr.bf16.mxu0 0
  %221 = vmatpush1.bf16.msra.mxu0 0
  %222 = vmatprep.subr.bf16.mxu0 0
  %223 = vmatpush1.bf16.msra.mxu0 0
  %224 = vmatprep.subr.bf16.mxu0 0
  %225 = vmatpush1.bf16.msra.mxu0 0
  %226 = vmatprep.subr.bf16.mxu0 0
  %227 = vmatpush1.bf16.msra.mxu0 0
  %228 = vmatprep.subr.bf16.mxu0 0
  %229 = vmatpush1.bf16.msra.mxu0 0
  %230 = vmatprep.subr.bf16.mxu0 0
  %231 = vmatpush1.bf16.msra.mxu0 0
  %232 = vmatprep.subr.bf16.mxu0 0
  %233 = vmatpush1.bf16.msra.mxu0 0
  %234 = vmatprep.subr.bf16.mxu0 0
  %235 = vmatpush1.bf16.msra.mxu0 0
  %236 = vmatprep.subr.bf16.mxu0 0
  %237 = vmatpush1.bf16.msra.mxu0 0
  %238 = vmatprep.subr.bf16.mxu0 0
  %239 = vmatpush1.bf16.msra.mxu0 0
  %240 = vmatprep.subr.bf16.mxu0 0
  %241 = vmatpush1.bf16.msra.mxu0 0
  %242 = vmatprep.subr.bf16.mxu0 0
  %243 = vmatpush1.bf16.msra.mxu0 0
  %244 = vmatprep.subr.bf16.mxu0 0
  %245 = vmatpush1.bf16.msra.mxu0 0
  %246 = vmatprep.subr.bf16.mxu0 0
  %247 = vmatpush1.bf16.msra.mxu0 0
  %248 = vmatprep.subr.bf16.mxu0 0
  %249 = vmatpush1.bf16.msra.mxu0 0
  %250 = vmatprep.mubr.bf16.mxu0 0
  %251 = vmatmul.mubr.bf16.gmra.mrb[0].mxu0 %v216
  %v252 = vpop.f32.mrb[0].mxu0
  %v253 = vadd.f32 %v186, %v252
  %v254 = vpop.f32.mrb[0].mxu0
  %v255 = vadd.f32 %v190, %v254
  %v256 = vpop.f32.mrb[0].mxu0
  %v257 = vpop.f32.mrb[0].mxu0
  %258 = vdwg.mxu0
  %259 = vmatprep.subr.bf16.mxu0 0
  %260 = vmatpush1.bf16.msra.mxu0 %v210
  %261 = vmatprep.subr.bf16.mxu0 0
  %262 = vmatpush1.bf16.msra.mxu0 0
  %263 = vmatprep.subr.bf16.mxu0 0
  %264 = vmatpush1.bf16.msra.mxu0 0
  %265 = vmatprep.subr.bf16.mxu0 0
  %266 = vmatpush1.bf16.msra.mxu0 0
  %267 = vmatprep.subr.bf16.mxu0 0
  %268 = vmatpush1.bf16.msra.mxu0 0
  %269 = vmatprep.subr.bf16.mxu0 0
  %270 = vmatpush1.bf16.msra.mxu0 0
  %271 = vmatprep.subr.bf16.mxu0 0
  %272 = vmatpush1.bf16.msra.mxu0 0
  %273 = vmatprep.subr.bf16.mxu0 0
  %274 = vmatpush1.bf16.msra.mxu0 0
  %275 = vmatprep.subr.bf16.mxu0 0
  %276 = vmatpush1.bf16.msra.mxu0 0
  %277 = vmatprep.subr.bf16.mxu0 0
  %278 = vmatpush1.bf16.msra.mxu0 0
  %279 = vmatprep.subr.bf16.mxu0 0
  %280 = vmatpush1.bf16.msra.mxu0 0
  %281 = vmatprep.subr.bf16.mxu0 0
  %282 = vmatpush1.bf16.msra.mxu0 0
  %283 = vmatprep.subr.bf16.mxu0 0
  %284 = vmatpush1.bf16.msra.mxu0 0
  %285 = vmatprep.subr.bf16.mxu0 0
  %286 = vmatpush1.bf16.msra.mxu0 0
  %287 = vmatprep.subr.bf16.mxu0 0
  %288 = vmatpush1.bf16.msra.mxu0 0
  %289 = vmatprep.subr.bf16.mxu0 0
  %290 = vmatpush1.bf16.msra.mxu0 0
  %291 = vmatprep.mubr.bf16.mxu0 0
  %292 = vmatmul.mubr.bf16.gmra.mrb[0].mxu0 %v216
  %v293 = vpop.f32.mrb[0].mxu0
  %v294 = vadd.f32 %v194, %v293
  %v295 = vpop.f32.mrb[0].mxu0
  %v296 = vpop.f32.mrb[0].mxu0
  %v297 = vpop.f32.mrb[0].mxu0
  %298 = vdwg.mxu0
  %v299 = vsub.f32 0.0, %v253
  %v300 = vsub.f32 0.0, %v255
  %v301 = vsub.f32 0.0, %v294
  %v302 = vmul.f32 %v299, 1.442695
  %v303 = vpow.pop %v302
  %v304 = vmul.f32 %v300, 1.442695
  %v305 = vpow.pop %v304
  %v306 = vmul.f32 %v301, 1.442695
  %v307 = vpow.pop %v306
  %v308 = vadd.f32 %v303, 1.0
  %v309 = vadd.f32 %v305, 1.0
  %v310 = vadd.f32 %v307, 1.0
  %v311 = vrcp.pop %v308
  %v312 = vmul.f32 1.0, %v311
  %v313 = vrcp.pop %v309
  %v314 = vmul.f32 1.0, %v313
  %v315 = vrcp.pop %v310
  %v316 = vmul.f32 1.0, %v315
  %317 = vst [vmem:[%s7] sm:$0xff] %v312
  %s318 = scalar_lea.vmem %s7, 8
  %319 = vst [vmem:[%s318] sm:$0xff] %v314
  %s320 = scalar_lea.vmem %s7, 16
  %321 = vst [vmem:[%s320] sm:$0xff] %v316
  // Predicated region
  $region30: #{goal_decoder_forward.1} parent=0 // pred_check
    _
  $region31: #{goal_decoder_forward.1} parent=0 // pred_check_branch
    %323 = sbr.rel (0) target = $region33
  $region32: #{goal_decoder_forward.1} parent=0 // pred_region
    _
  $region33: #{goal_decoder_forward.1} parent=0 // pred_fallthru
    _
  // Predicated region
  $region34: #{goal_decoder_forward.1} parent=0 // pred_check
    _
  $region35: #{goal_decoder_forward.1} parent=0 // pred_check_branch
    %325 = sbr.rel (0) target = $region37
  $region36: #{goal_decoder_forward.1} parent=0 // pred_region
    _
  $region37: #{goal_decoder_forward.1} parent=0 // pred_fallthru
    _

</llo_original>
